<compile_context>
chip_gen: v7x
topology: tpu7x:2x2x1
jax: 0.10.0
libtpu: 0.0.40
codegen_flags: <defaults>
</compile_context>

<pallas_src>
import functools

import jax
import jax.numpy as jnp
from jax.experimental import pallas as pl
from jax.experimental.pallas import tpu as pltpu

LANE = 128


def _round_up(x, m):
    return ((x + m - 1) // m) * m


def _pick_batch_tile(b, c, acc_budget_bytes=4 * 1024 * 1024):
    """Largest divisor of b that (a) leaves >= 2 batch tiles when b >= 2 so the
    'parallel' batch axis can shard across v7x's two TensorCores, (b) is <= 64,
    and (c) keeps the f32 [TB, C, 128] accumulator under acc_budget_bytes.
    Prefers multiples of 8."""
    if b <= 1:
        return 1
    cap = min(64, b // 2)
    acc_cap = max(1, acc_budget_bytes // max(1, c * LANE * 4))
    cap = max(1, min(cap, acc_cap))
    divs = [d for d in range(cap, 0, -1) if b % d == 0]
    for d in divs:
        if d % 8 == 0:
            return d
    return divs[0]


def _pick_spatial_tile(hw_pad, unit_bytes, budget_bytes=8 * 1024 * 1024,
                       max_chunks=64):
    """Largest multiple of 128 that divides hw_pad, fits the per-buffer byte
    budget, and keeps the unrolled lane-chunk count bounded."""
    max_elems = max(LANE, budget_bytes // max(1, unit_bytes))
    max_elems = min(max_elems, max_chunks * LANE, hw_pad)
    t = (max_elems // LANE) * LANE
    while t > LANE and hw_pad % t != 0:
        t -= LANE
    return t  # hw_pad is a multiple of LANE, so t==LANE always divides it


def exit_block_kernel(x_ref, w1_ref, b1_ref, w2_ref, b2_ref, out_ref, acc_ref,
                      *, inv_hw):
    """x_ref: [TB, C, T_HW] (T_HW multiple of 128); w1: [C, hidden];
    b1: [1, hidden]; w2: [hidden, OUT_PAD]; b2: [1, OUT_PAD];
    out_ref: [1, TB, OUT_PAD]; acc_ref: [TB, C, 128] f32 lane-chunk accumulator."""
    k = pl.program_id(1)
    tb, c, t_hw = x_ref.shape
    n_chunks = t_hw // LANE

    @pl.when(k == 0)
    def _init():
        acc_ref[...] = jnp.zeros_like(acc_ref)

    # Hot loop: lane-aligned VPU adds only -- no cross-lane reduce and no
    # sublane->lane relayout per grid step.
    acc = acc_ref[...]
    for ci in range(n_chunks):
        acc = acc + x_ref[:, :, ci * LANE:(ci + 1) * LANE].astype(jnp.float32)
    acc_ref[...] = acc

    @pl.when(k == pl.num_programs(1) - 1)
    def _finalize():
        # Single cross-lane reduce per batch tile + the AdaptiveAvgPool(1) scale
        # (exact: applied to the f32 accumulator, not folded into the weights).
        pooled = jnp.sum(acc_ref[...], axis=-1) * inv_hw            # [TB, C] f32
        # Keep weights in their stored dtype; MXU accumulates in f32.
        h = jnp.dot(pooled.astype(w1_ref.dtype), w1_ref[...],
                    preferred_element_type=jnp.float32)
        h = jnp.maximum(h + b1_ref[...].astype(jnp.float32), 0.0)
        y = jnp.dot(h.astype(w2_ref.dtype), w2_ref[...],
                    preferred_element_type=jnp.float32)
        y = y + b2_ref[...].astype(jnp.float32)
        # NOTE: the out block index is constant over k; it must only be written
        # here, on the last spatial step (write-back-on-block-change semantics).
        out_ref[0] = y.astype(out_ref.dtype)


def exit_block(x_nchw, w1, b1, w2, b2, *, tile_b=None, tile_hw=None,
               vmem_limit_bytes=None, x_buffer_budget_bytes=8 * 1024 * 1024):
    """x_nchw: [B, C, H, W]; w1: [C, hidden]; b1: [hidden] or [1, hidden];
    w2: [hidden, out]; b2: [out] or [1, out] -> returns [B, out] float32."""
    B, C, H, W = x_nchw.shape
    HW = H * W
    hidden = w1.shape[-1]
    out_c = w2.shape[-1]
    out_pad = _round_up(max(out_c, 1), LANE)

    x_flat = x_nchw.reshape(B, C, HW)
    itemsize_x = jnp.dtype(x_flat.dtype).itemsize

    b1_r = jnp.reshape(b1, (1, hidden))
    # Zero-pad the second Linear to a lane-dense (multiple-of-128) output.
    w2_p = jnp.zeros((hidden, out_pad), w2.dtype).at[:, :out_c].set(w2)
    b2_p = jnp.zeros((1, out_pad), b2.dtype).at[:, :out_c].set(
        jnp.reshape(b2, (1, out_c)))

    # ---- tile selection -------------------------------------------------
    if tile_b is None:
        tile_b = _pick_batch_tile(B, C)
    assert B % tile_b == 0, "batch tile must divide B"
    n_btiles = B // tile_b

    if tile_hw is not None:
        assert tile_hw % LANE == 0, "spatial tile must be a multiple of 128"
        hw_pad = _round_up(HW, tile_hw)
    else:
        hw_pad = _round_up(HW, LANE)
        tile_hw = _pick_spatial_tile(hw_pad, tile_b * C * itemsize_x,
                                     budget_bytes=x_buffer_budget_bytes)
    assert hw_pad % tile_hw == 0

    if hw_pad != HW:
        # Zero-pad the spatial axis so every block is lane-aligned; zeros do not
        # change the spatial SUM and we scale by 1/HW (the true size) in-kernel.
        # TODO(synk): an NHWC input layout would avoid this pad for small maps.
        x_flat = jnp.pad(x_flat, ((0, 0), (0, 0), (0, hw_pad - HW)))

    grid = (n_btiles, hw_pad // tile_hw)

    # ---- VMEM budget (double-buffered x + resident weights + out + scratch) --
    x_buf = tile_b * C * tile_hw * itemsize_x
    w_buf = ((C * hidden + hidden) * jnp.dtype(w1.dtype).itemsize
             + (hidden * out_pad + out_pad) * jnp.dtype(w2_p.dtype).itemsize)
    out_buf = tile_b * out_pad * 4
    acc_buf = tile_b * C * LANE * 4
    footprint = 2 * x_buf + 2 * w_buf + 2 * out_buf + acc_buf
    if vmem_limit_bytes is None:
        # Real footprint with headroom, capped well below v7x's 64 MiB VMEM.
        vmem_limit_bytes = int(min(48 * 1024 * 1024,
                                   max(16 * 1024 * 1024, 2 * footprint)))

    x_bytes = B * C * hw_pad * itemsize_x
    w_bytes = (w1.size * jnp.dtype(w1.dtype).itemsize
               + b1_r.size * jnp.dtype(b1_r.dtype).itemsize
               + w2_p.size * jnp.dtype(w2_p.dtype).itemsize
               + b2_p.size * jnp.dtype(b2_p.dtype).itemsize)
    out_bytes = B * out_pad * 4
    cost = pl.CostEstimate(
        flops=int(B * C * hw_pad + 2 * B * C * hidden + 2 * B * hidden * out_pad),
        transcendentals=0,
        bytes_accessed=int(x_bytes + w_bytes + out_bytes),
    )

    kernel = functools.partial(exit_block_kernel, inv_hw=1.0 / float(HW))

    def _build(single_buffer_weights):
        # Constant index_maps -> weights fetched once; request single-buffering
        # so they don't waste a second VMEM buffer.
        w_kwargs = ({"pipeline_mode": pl.Buffered(1)}
                    if single_buffer_weights else {})
        grid_spec = pltpu.PrefetchScalarGridSpec(
            num_scalar_prefetch=0,
            grid=grid,
            in_specs=[
                pl.BlockSpec((tile_b, C, tile_hw), lambda i, k: (i, 0, k)),
                pl.BlockSpec((C, hidden), lambda i, k: (0, 0), **w_kwargs),
                pl.BlockSpec((1, hidden), lambda i, k: (0, 0), **w_kwargs),
                pl.BlockSpec((hidden, out_pad), lambda i, k: (0, 0), **w_kwargs),
                pl.BlockSpec((1, out_pad), lambda i, k: (0, 0), **w_kwargs),
            ],
            # Output reshaped to [n_btiles, tile_b, out_pad] so the block's last
            # two dims are always (full, 128k) -> legal & unmasked for any tile_b.
            out_specs=pl.BlockSpec((1, tile_b, out_pad), lambda i, k: (i, 0, 0)),
            scratch_shapes=[pltpu.VMEM((tile_b, C, LANE), jnp.float32)],
        )
        return pl.pallas_call(
            kernel,
            out_shape=jax.ShapeDtypeStruct((n_btiles, tile_b, out_pad),
                                           jnp.float32),
            grid_spec=grid_spec,
            compiler_params=pltpu.CompilerParams(
                dimension_semantics=("parallel", "arbitrary"),
                vmem_limit_bytes=vmem_limit_bytes,
            ),
            cost_estimate=cost,
        )

    args = (x_flat, w1, b1_r, w2_p, b2_p)
    try:
        out_padded = _build(True)(*args)
    except Exception:
        # pl.Buffered(1) single-buffering not supported by this JAX/Mosaic
        # version; fall back to default double-buffered weights (tiny cost).
        out_padded = _build(False)(*args)

    return out_padded.reshape(B, out_pad)[:, :out_c]


if __name__ == "__main__":
    # Small shapes consistent with the module.
    B, C, H, W = 2, 4, 16, 16
    hidden_sizes = 32
    out_channels = 10

    key = jax.random.PRNGKey(0)
    kx, k1, kb1, k2, kb2 = jax.random.split(key, 5)

    x = jax.random.normal(kx, (B, C, H, W), dtype=jnp.float32)

    # PyTorch Linear params stored pre-transposed as [in, out] for the kernel.
    bound1 = 1.0 / jnp.sqrt(C)
    w1 = jax.random.uniform(k1, (C, hidden_sizes), jnp.float32, -bound1, bound1)
    b1 = jax.random.uniform(kb1, (1, hidden_sizes), jnp.float32, -bound1, bound1)
    bound2 = 1.0 / jnp.sqrt(hidden_sizes)
    w2 = jax.random.uniform(k2, (hidden_sizes, out_channels), jnp.float32,
                            -bound2, bound2)
    b2 = jax.random.uniform(kb2, (1, out_channels), jnp.float32, -bound2, bound2)

    # tile_hw=128 exercises the multi-step spatial accumulation (HW=256 -> 2
    # steps) and the batch-tile picker gives tile_b=1 -> 2 parallel batch tiles.
    out = exit_block(x, w1, b1, w2, b2, tile_hw=128)
    out = jax.block_until_ready(out)

    # Pure-JAX reference (module semantics: mean -> linear -> relu -> linear).
    pooled_ref = jnp.mean(x.reshape(B, C, H * W), axis=-1)
    h_ref = jnp.maximum(pooled_ref @ w1 + b1, 0.0)
    y_ref = h_ref @ w2 + b2
    assert out.shape == (B, out_channels)
    assert jnp.allclose(out, y_ref, atol=1e-4, rtol=1e-4), (
        f"max abs err {jnp.max(jnp.abs(out - y_ref))}")

    print("KERNEL_OK")
</pallas_src>

<mosaic_0001>
module attributes {stable_mosaic.version = 11 : i64} {
  func.func @exit_block_kernel(%arg0: i32, %arg1: i32, %arg2: memref<1x4x128xf32, #tpu.memory_space<vmem>>, %arg3: memref<4x32xf32, #tpu.memory_space<vmem>>, %arg4: memref<1x32xf32, #tpu.memory_space<vmem>>, %arg5: memref<32x128xf32, #tpu.memory_space<vmem>>, %arg6: memref<1x128xf32, #tpu.memory_space<vmem>>, %arg7: memref<1x1x128xf32, #tpu.memory_space<vmem>>, %arg8: memref<1x4x128xf32, #tpu.memory_space<vmem>>) attributes {dimension_semantics = [#tpu.dimension_semantics<parallel>, #tpu.dimension_semantics<arbitrary>], iteration_bounds = array<i64: 2, 2>, scalar_prefetch = 0 : i64, scratch_operands = 1 : i64, tpu.core_type = #tpu.core_type<tc>, window_params = [{transform_indices = @transform_0, window_bounds = array<i64: 1, 4, 128>}, {pipeline_mode = #tpu.pipeline_mode<synchronous>, transform_indices = @transform_1, window_bounds = array<i64: 4, 32>}, {pipeline_mode = #tpu.pipeline_mode<synchronous>, transform_indices = @transform_2, window_bounds = array<i64: 1, 32>}, {pipeline_mode = #tpu.pipeline_mode<synchronous>, transform_indices = @transform_3, window_bounds = array<i64: 32, 128>}, {pipeline_mode = #tpu.pipeline_mode<synchronous>, transform_indices = @transform_4, window_bounds = array<i64: 1, 128>}, {transform_indices = @transform_5, window_bounds = array<i64: 1, 1, 128>}]} {
    %c0_i32 = arith.constant 0 : i32
    %0 = arith.cmpi eq, %arg1, %c0_i32 : i32
    %1 = arith.extui %0 : i1 to i32
    %c0_i32_0 = arith.constant 0 : i32
    %2 = arith.cmpi ne, %1, %c0_i32_0 : i32
    scf.if %2 {
      %cst = arith.constant 0.000000e+00 : f32
      %10 = vector.broadcast %cst : f32 to vector<1x4x128xf32>
      %c0_10 = arith.constant 0 : index
      %c0_11 = arith.constant 0 : index
      %c0_12 = arith.constant 0 : index
      %11 = vector.load %arg8[%c0_10, %c0_11, %c0_12] : memref<1x4x128xf32, #tpu.memory_space<vmem>>, vector<1x4x128xf32>
      tpu.vector_store %arg8[%c0_10, %c0_11, %c0_12], %10 {strides = array<i32>} : memref<1x4x128xf32, #tpu.memory_space<vmem>>, vector<1x4x128xf32>,
    } else {
    }
    %c0 = arith.constant 0 : index
    %c0_1 = arith.constant 0 : index
    %c0_2 = arith.constant 0 : index
    %3 = vector.load %arg8[%c0, %c0_1, %c0_2] : memref<1x4x128xf32, #tpu.memory_space<vmem>>, vector<1x4x128xf32>
    %c0_3 = arith.constant 0 : index
    %c0_4 = arith.constant 0 : index
    %c0_5 = arith.constant 0 : index
    %4 = vector.load %arg2[%c0_3, %c0_4, %c0_5] : memref<1x4x128xf32, #tpu.memory_space<vmem>>, vector<1x4x128xf32>
    %5 = arith.addf %3, %4 : vector<1x4x128xf32>
    %c0_6 = arith.constant 0 : index
    %c0_7 = arith.constant 0 : index
    %c0_8 = arith.constant 0 : index
    %6 = vector.load %arg8[%c0_6, %c0_7, %c0_8] : memref<1x4x128xf32, #tpu.memory_space<vmem>>, vector<1x4x128xf32>
    tpu.vector_store %arg8[%c0_6, %c0_7, %c0_8], %5 {strides = array<i32>} : memref<1x4x128xf32, #tpu.memory_space<vmem>>, vector<1x4x128xf32>,
    %c1_i32 = arith.constant 1 : i32
    %7 = arith.cmpi eq, %arg1, %c1_i32 : i32
    %8 = arith.extui %7 : i1 to i32
    %c0_i32_9 = arith.constant 0 : i32
    %9 = arith.cmpi ne, %8, %c0_i32_9 : i32
    scf.if %9 {
      %c0_10 = arith.constant 0 : index
      %c0_11 = arith.constant 0 : index
      %c0_12 = arith.constant 0 : index
      %10 = vector.load %arg8[%c0_10, %c0_11, %c0_12] : memref<1x4x128xf32, #tpu.memory_space<vmem>>, vector<1x4x128xf32>
      %cst = arith.constant dense<0.000000e+00> : vector<1x4xf32>
      %11 = vector.multi_reduction <add>, %10, %cst [2] : vector<1x4x128xf32> to vector<1x4xf32>
      %cst_13 = arith.constant 3.906250e-03 : f32
      %12 = vector.broadcast %cst_13 : f32 to vector<1x4xf32>
      %13 = arith.mulf %11, %12 : vector<1x4xf32>
      %c0_14 = arith.constant 0 : index
      %c0_15 = arith.constant 0 : index
      %14 = vector.load %arg3[%c0_14, %c0_15] : memref<4x32xf32, #tpu.memory_space<vmem>>, vector<4x32xf32>
      %cst_16 = arith.constant dense<0.000000e+00> : vector<1x32xf32>
      %15 = tpu.matmul %13, %14, %cst_16 {dimension_numbers = #tpu.dot_dimension_numbers<[1], [0], [0], [1], [0, 0, 1, 1], [], []>} : vector<1x4xf32>, vector<4x32xf32>, vector<1x32xf32> -> vector<1x32xf32>
      %c0_17 = arith.constant 0 : index
      %c0_18 = arith.constant 0 : index
      %16 = vector.load %arg4[%c0_17, %c0_18] : memref<1x32xf32, #tpu.memory_space<vmem>>, vector<1x32xf32>
      %17 = arith.addf %15, %16 : vector<1x32xf32>
      %cst_19 = arith.constant 0.000000e+00 : f32
      %18 = vector.broadcast %cst_19 : f32 to vector<1x32xf32>
      %19 = arith.maximumf %17, %18 : vector<1x32xf32>
      %c0_20 = arith.constant 0 : index
      %c0_21 = arith.constant 0 : index
      %20 = vector.load %arg5[%c0_20, %c0_21] : memref<32x128xf32, #tpu.memory_space<vmem>>, vector<32x128xf32>
      %cst_22 = arith.constant dense<0.000000e+00> : vector<1x128xf32>
      %21 = tpu.matmul %19, %20, %cst_22 {dimension_numbers = #tpu.dot_dimension_numbers<[1], [0], [0], [1], [0, 0, 1, 1], [], []>} : vector<1x32xf32>, vector<32x128xf32>, vector<1x128xf32> -> vector<1x128xf32>
      %c0_23 = arith.constant 0 : index
      %c0_24 = arith.constant 0 : index
      %22 = vector.load %arg6[%c0_23, %c0_24] : memref<1x128xf32, #tpu.memory_space<vmem>>, vector<1x128xf32>
      %23 = arith.addf %21, %22 : vector<1x128xf32>
      %c0_25 = arith.constant 0 : index
      %c0_26 = arith.constant 0 : index
      %c0_27 = arith.constant 0 : index
      %24 = vector.load %arg7[%c0_25, %c0_26, %c0_27] : memref<1x1x128xf32, #tpu.memory_space<vmem>>, vector<1x1x128xf32>
      %25 = vector.shape_cast %24 : vector<1x1x128xf32> to vector<1x128xf32>
      %26 = vector.shape_cast %23 : vector<1x128xf32> to vector<1x1x128xf32>
      tpu.vector_store %arg7[%c0_25, %c0_26, %c0_27], %26 {strides = array<i32>} : memref<1x1x128xf32, #tpu.memory_space<vmem>>, vector<1x1x128xf32>,
    } else {
    }
    return
  }
  func.func @transform_0(%arg0: i32, %arg1: i32) -> (i32, i32, i32) {
    %c0_i32 = arith.constant 0 : i32
    %c0_i32_0 = arith.constant 0 : i32
    return %arg0, %c0_i32, %arg1 : i32, i32, i32
  }
  func.func @transform_1(%arg0: i32, %arg1: i32) -> (i32, i32) {
    %c0_i32 = arith.constant 0 : i32
    %c0_i32_0 = arith.constant 0 : i32
    %c0_i32_1 = arith.constant 0 : i32
    return %c0_i32, %c0_i32_0 : i32, i32
  }
  func.func @transform_2(%arg0: i32, %arg1: i32) -> (i32, i32) {
    %c0_i32 = arith.constant 0 : i32
    %c0_i32_0 = arith.constant 0 : i32
    %c0_i32_1 = arith.constant 0 : i32
    return %c0_i32, %c0_i32_0 : i32, i32
  }
  func.func @transform_3(%arg0: i32, %arg1: i32) -> (i32, i32) {
    %c0_i32 = arith.constant 0 : i32
    %c0_i32_0 = arith.constant 0 : i32
    %c0_i32_1 = arith.constant 0 : i32
    return %c0_i32, %c0_i32_0 : i32, i32
  }
  func.func @transform_4(%arg0: i32, %arg1: i32) -> (i32, i32) {
    %c0_i32 = arith.constant 0 : i32
    %c0_i32_0 = arith.constant 0 : i32
    %c0_i32_1 = arith.constant 0 : i32
    return %c0_i32, %c0_i32_0 : i32, i32
  }
  func.func @transform_5(%arg0: i32, %arg1: i32) -> (i32, i32, i32) {
    %c0_i32 = arith.constant 0 : i32
    %c0_i32_0 = arith.constant 0 : i32
    %c0_i32_1 = arith.constant 0 : i32
    return %arg0, %c0_i32, %c0_i32_0 : i32, i32, i32
  }
}

module attributes {stable_mosaic.version = 11 : i64} {
  func.func @exit_block_kernel(%arg0: i32, %arg1: i32, %arg2: memref<1x4x128xf32, #tpu.memory_space<vmem>>, %arg3: memref<4x32xf32, #tpu.memory_space<vmem>>, %arg4: memref<1x32xf32, #tpu.memory_space<vmem>>, %arg5: memref<32x128xf32, #tpu.memory_space<vmem>>, %arg6: memref<1x128xf32, #tpu.memory_space<vmem>>, %arg7: memref<1x1x128xf32, #tpu.memory_space<vmem>>, %arg8: memref<1x4x128xf32, #tpu.memory_space<vmem>>) attributes {dimension_semantics = [#tpu.dimension_semantics<parallel>, #tpu.dimension_semantics<arbitrary>], iteration_bounds = array<i64: 2, 2>, scalar_prefetch = 0 : i64, scratch_operands = 1 : i64, tpu.core_type = #tpu.core_type<tc>, window_params = [{transform_indices = @transform_0, window_bounds = array<i64: 1, 4, 128>}, {pipeline_mode = #tpu.pipeline_mode<synchronous>, transform_indices = @transform_1, window_bounds = array<i64: 4, 32>}, {pipeline_mode = #tpu.pipeline_mode<synchronous>, transform_indices = @transform_2, window_bounds = array<i64: 1, 32>}, {pipeline_mode = #tpu.pipeline_mode<synchronous>, transform_indices = @transform_3, window_bounds = array<i64: 32, 128>}, {pipeline_mode = #tpu.pipeline_mode<synchronous>, transform_indices = @transform_4, window_bounds = array<i64: 1, 128>}, {transform_indices = @transform_5, window_bounds = array<i64: 1, 1, 128>}]} {
    %c0_i32 = arith.constant 0 : i32
    %0 = arith.cmpi eq, %arg1, %c0_i32 : i32
    %1 = arith.extui %0 : i1 to i32
    %c0_i32_0 = arith.constant 0 : i32
    %2 = arith.cmpi ne, %1, %c0_i32_0 : i32
    scf.if %2 {
      %cst = arith.constant 0.000000e+00 : f32
      %10 = vector.broadcast %cst : f32 to vector<1x4x128xf32>
      %c0_10 = arith.constant 0 : index
      %c0_11 = arith.constant 0 : index
      %c0_12 = arith.constant 0 : index
      %11 = vector.load %arg8[%c0_10, %c0_11, %c0_12] : memref<1x4x128xf32, #tpu.memory_space<vmem>>, vector<1x4x128xf32>
      tpu.vector_store %arg8[%c0_10, %c0_11, %c0_12], %10 {strides = array<i32>} : memref<1x4x128xf32, #tpu.memory_space<vmem>>, vector<1x4x128xf32>,
    } else {
    }
    %c0 = arith.constant 0 : index
    %c0_1 = arith.constant 0 : index
    %c0_2 = arith.constant 0 : index
    %3 = vector.load %arg8[%c0, %c0_1, %c0_2] : memref<1x4x128xf32, #tpu.memory_space<vmem>>, vector<1x4x128xf32>
    %c0_3 = arith.constant 0 : index
    %c0_4 = arith.constant 0 : index
    %c0_5 = arith.constant 0 : index
    %4 = vector.load %arg2[%c0_3, %c0_4, %c0_5] : memref<1x4x128xf32, #tpu.memory_space<vmem>>, vector<1x4x128xf32>
    %5 = arith.addf %3, %4 : vector<1x4x128xf32>
    %c0_6 = arith.constant 0 : index
    %c0_7 = arith.constant 0 : index
    %c0_8 = arith.constant 0 : index
    %6 = vector.load %arg8[%c0_6, %c0_7, %c0_8] : memref<1x4x128xf32, #tpu.memory_space<vmem>>, vector<1x4x128xf32>
    tpu.vector_store %arg8[%c0_6, %c0_7, %c0_8], %5 {strides = array<i32>} : memref<1x4x128xf32, #tpu.memory_space<vmem>>, vector<1x4x128xf32>,
    %c1_i32 = arith.constant 1 : i32
    %7 = arith.cmpi eq, %arg1, %c1_i32 : i32
    %8 = arith.extui %7 : i1 to i32
    %c0_i32_9 = arith.constant 0 : i32
    %9 = arith.cmpi ne, %8, %c0_i32_9 : i32
    scf.if %9 {
      %c0_10 = arith.constant 0 : index
      %c0_11 = arith.constant 0 : index
      %c0_12 = arith.constant 0 : index
      %10 = vector.load %arg8[%c0_10, %c0_11, %c0_12] : memref<1x4x128xf32, #tpu.memory_space<vmem>>, vector<1x4x128xf32>
      %cst = arith.constant dense<0.000000e+00> : vector<1x4xf32>
      %11 = vector.multi_reduction <add>, %10, %cst [2] : vector<1x4x128xf32> to vector<1x4xf32>
      %cst_13 = arith.constant 3.906250e-03 : f32
      %12 = vector.broadcast %cst_13 : f32 to vector<1x4xf32>
      %13 = arith.mulf %11, %12 : vector<1x4xf32>
      %c0_14 = arith.constant 0 : index
      %c0_15 = arith.constant 0 : index
      %14 = vector.load %arg3[%c0_14, %c0_15] : memref<4x32xf32, #tpu.memory_space<vmem>>, vector<4x32xf32>
      %cst_16 = arith.constant dense<0.000000e+00> : vector<1x32xf32>
      %15 = tpu.matmul %13, %14, %cst_16 {dimension_numbers = #tpu.dot_dimension_numbers<[1], [0], [0], [1], [0, 0, 1, 1], [], []>} : vector<1x4xf32>, vector<4x32xf32>, vector<1x32xf32> -> vector<1x32xf32>
      %c0_17 = arith.constant 0 : index
      %c0_18 = arith.constant 0 : index
      %16 = vector.load %arg4[%c0_17, %c0_18] : memref<1x32xf32, #tpu.memory_space<vmem>>, vector<1x32xf32>
      %17 = arith.addf %15, %16 : vector<1x32xf32>
      %cst_19 = arith.constant 0.000000e+00 : f32
      %18 = vector.broadcast %cst_19 : f32 to vector<1x32xf32>
      %19 = arith.maximumf %17, %18 : vector<1x32xf32>
      %c0_20 = arith.constant 0 : index
      %c0_21 = arith.constant 0 : index
      %20 = vector.load %arg5[%c0_20, %c0_21] : memref<32x128xf32, #tpu.memory_space<vmem>>, vector<32x128xf32>
      %cst_22 = arith.constant dense<0.000000e+00> : vector<1x128xf32>
      %21 = tpu.matmul %19, %20, %cst_22 {dimension_numbers = #tpu.dot_dimension_numbers<[1], [0], [0], [1], [0, 0, 1, 1], [], []>} : vector<1x32xf32>, vector<32x128xf32>, vector<1x128xf32> -> vector<1x128xf32>
      %c0_23 = arith.constant 0 : index
      %c0_24 = arith.constant 0 : index
      %22 = vector.load %arg6[%c0_23, %c0_24] : memref<1x128xf32, #tpu.memory_space<vmem>>, vector<1x128xf32>
      %23 = arith.addf %21, %22 : vector<1x128xf32>
      %c0_25 = arith.constant 0 : index
      %c0_26 = arith.constant 0 : index
      %c0_27 = arith.constant 0 : index
      %24 = vector.load %arg7[%c0_25, %c0_26, %c0_27] : memref<1x1x128xf32, #tpu.memory_space<vmem>>, vector<1x1x128xf32>
      %25 = vector.shape_cast %24 : vector<1x1x128xf32> to vector<1x128xf32>
      %26 = vector.shape_cast %23 : vector<1x128xf32> to vector<1x1x128xf32>
      tpu.vector_store %arg7[%c0_25, %c0_26, %c0_27], %26 {strides = array<i32>} : memref<1x1x128xf32, #tpu.memory_space<vmem>>, vector<1x1x128xf32>,
    } else {
    }
    return
  }
  func.func @transform_0(%arg0: i32, %arg1: i32) -> (i32, i32, i32) {
    %c0_i32 = arith.constant 0 : i32
    %c0_i32_0 = arith.constant 0 : i32
    return %arg0, %c0_i32, %arg1 : i32, i32, i32
  }
  func.func @transform_1(%arg0: i32, %arg1: i32) -> (i32, i32) {
    %c0_i32 = arith.constant 0 : i32
    %c0_i32_0 = arith.constant 0 : i32
    %c0_i32_1 = arith.constant 0 : i32
    return %c0_i32, %c0_i32_0 : i32, i32
  }
  func.func @transform_2(%arg0: i32, %arg1: i32) -> (i32, i32) {
    %c0_i32 = arith.constant 0 : i32
    %c0_i32_0 = arith.constant 0 : i32
    %c0_i32_1 = arith.constant 0 : i32
    return %c0_i32, %c0_i32_0 : i32, i32
  }
  func.func @transform_3(%arg0: i32, %arg1: i32) -> (i32, i32) {
    %c0_i32 = arith.constant 0 : i32
    %c0_i32_0 = arith.constant 0 : i32
    %c0_i32_1 = arith.constant 0 : i32
    return %c0_i32, %c0_i32_0 : i32, i32
  }
  func.func @transform_4(%arg0: i32, %arg1: i32) -> (i32, i32) {
    %c0_i32 = arith.constant 0 : i32
    %c0_i32_0 = arith.constant 0 : i32
    %c0_i32_1 = arith.constant 0 : i32
    return %c0_i32, %c0_i32_0 : i32, i32
  }
  func.func @transform_5(%arg0: i32, %arg1: i32) -> (i32, i32, i32) {
    %c0_i32 = arith.constant 0 : i32
    %c0_i32_0 = arith.constant 0 : i32
    %c0_i32_1 = arith.constant 0 : i32
    return %arg0, %c0_i32, %c0_i32_0 : i32, i32, i32
  }
}

</mosaic_0001>

<llo_original>
// kernel: tpu_custom_call.1
$region0: #{tpu_custom_call.1}
  #allocation0 [shape = 'u32[]', space=smem, size = 0x4, offset = 0x4, fixed_abs, tag = 'smem constant byte address 0x4 - core index']
  #allocation1 [shape = 'u32[144,128]{1,0:T(1,128)}', space=vmem, size = 0x12000, scoped, tag = 'internal scratch']
  #allocation2 [shape = 'f32[1,4,128]{2,1,0:T(4,128)}', space=vmem, size = 0x800, scoped, tag = 'scratch operand']
  %s0 = inlined_call_operand.hbm [shape: f32[2,4,256], index: 0, kind: input, shape index: {}]
  %s1 = inlined_call_operand.hbm [shape: f32[4,32], index: 1, kind: input, shape index: {}]
  %s2 = inlined_call_operand.vmem [shape: f32[1,32], index: 2, kind: input, shape index: {}]
  %s3 = inlined_call_operand.hbm [shape: f32[32,128], index: 3, kind: input, shape index: {}]
  %s4 = inlined_call_operand.vmem [shape: f32[1,128], index: 4, kind: input, shape index: {}]
  %s5 = inlined_call_operand.hbm [shape: f32[2,1,128], index: 5, kind: output, shape index: {}]
  %s6 = sld [smem:[#allocation0]]
  $region73: #{tpu_custom_call.1} parent=0
    _
  %s8 = ssub.s32 1, %s6
  %s9 = scalar_select 0, %s8, %s6
  $region1: #{tpu_custom_call.1} parent=0
    #allocation3 [shape = 'u8[4096]{0}', space=vmem, size = 0x1000, scoped, tag = 'input window, operand 0']
    #allocation4 [shape = 's32[2]{0}', space=sflag, size = 0x8, scoped, tag = 'scoped memory for tpu_custom_call.1']
    #allocation5 [shape = 's32[2]{0}', space=sflag, size = 0x8, scoped, tag = 'scoped memory for tpu_custom_call.1']
    #allocation6 [shape = 'u8[2048]{0}', space=vmem, size = 0x800, scoped, tag = 'input window, operand 1, single buffered']
    #allocation7 [shape = 's32[1]{0}', space=sflag, size = 0x4, scoped, tag = 'scoped memory for tpu_custom_call.1']
    #allocation8 [shape = 'u8[16384]{0}', space=vmem, size = 0x4000, scoped, tag = 'input window, operand 3, single buffered']
    #allocation9 [shape = 'u8[1024]{0}', space=vmem, size = 0x400, scoped, tag = 'output window, operand 0']
    %10 = vsyncpa [#allocation4], 0
    %s11 = scalar_lea.sflag [#allocation4], 1
    %12 = vsyncpa %s11, 0
    %13 = vsyncpa [#allocation7], 0
    %14 = vsyncpa [#allocation5], 0
    %s15 = scalar_lea.sflag [#allocation5], 1
    %16 = vsyncpa %s15, 0
    loop: start=0, step=1, limit=6
    $region2: #{tpu_custom_call.1} parent=1 // loop_pre_header
      _
    $region3: #{tpu_custom_call.1} parent=1 // loop_header
      %s18 = sphi 0, %s22
      %p19 = scmp.ge.s32.totalorder %s18, 6
      %s25 = sphi 0, %s37
      %s26 = sphi 0, %s33
      %s27 = sphi 0, %s25
      %s28 = sphi 0, %s26
      %s29 = sphi 0, %s27
      %s30 = sphi 0, %s28
      %s42 = sphi 0, %s44
      %s45 = sphi 0, %s42
      %s46 = sphi 0, %s45
      %s62 = sphi 0, %s46
      %s66 = sphi 0, %s66
      %s68 = sphi 0, %s66
      %s69 = sphi 0, %s68
      %s83 = sphi 0, %s69
      %s87 = sphi 0, %s87
      %s89 = sphi 0, %s87
      %s90 = sphi 0, %s89
      %s104 = sphi 0, %s90
      %s108 = sphi 0, %s108
      %s110 = sphi 0, %s108
      %s111 = sphi 0, %s110
      %s125 = sphi 0, %s111
      %s129 = sphi 0, %s129
      %s131 = sphi 0, %s129
      %s132 = sphi 0, %s131
      %s146 = sphi 0, %s132
      %s152 = sphi 0, %s154
      %s155 = sphi 0, %s152
      %s156 = sphi 0, %s155
      %s172 = sphi 0, %s156
    $region4: #{tpu_custom_call.1} parent=1 // loop_header_branch
      %21 = sbr.rel (%p19) target = $region8
    $region5: #{tpu_custom_call.1} parent=1 // loop_body
      %s23 = ssub.s32 %s18, 1
      %s24 = ssub.s32 %s18, 2
      %s31 = sadd.s32 1, %s26
      %p32 = scmp.ge.s32.totalorder %s31, 2
      %s33 = scalar_select %p32, 0, %s31
      %s34 = sadd.s32 1, %s25
      %s35 = scalar_select %p32, %s34, %s25
      %p36 = scmp.ge.s32.totalorder %s35, 2
      %s37 = scalar_select %p36, 0, %s35
      %s38 = ssub.s32 %s25, %s37
      %s39 = ssub.s32 %s26, %s33
      %s40 = sor.u32 %s38, %s39
      %p41 = scmp.eq.s32.totalorder %s40, 0
      %s43 = sadd.s32 %s42, 1
      %s44 = scalar_select %p41, %s42, %s43
      %p47 = pneg %p41
      %p48 = scmp.eq.s32.totalorder %s18, 3
      %p49 = por %p47, %p48
      %p50 = scmp.ne.s32.totalorder %s42, %s45
      %p51 = scmp.eq.s32.totalorder %s18, 0
      %p52 = por %p50, %p51
      %p53 = scmp.ne.s32.totalorder %s42, %s45
      %p54 = scmp.eq.s32.totalorder %s23, 3
      %p55 = por %p53, %p54
      %p56 = scmp.ne.s32.totalorder %s45, %s46
      %p57 = scmp.eq.s32.totalorder %s23, 0
      %p58 = por %p56, %p57
      %p59 = scmp.ne.s32.totalorder %s45, %s46
      %p60 = scmp.eq.s32.totalorder %s24, 3
      %p61 = por %p59, %p60
      %p63 = scmp.ne.s32.totalorder %s46, %s62
      %p64 = scmp.eq.s32.totalorder %s24, 0
      %p65 = por %p63, %p64
      %s67 = sadd.s32 %s66, 1
      %p70 = scmp.eq.s32.totalorder %s18, 3
      %p71 = scmp.ne.s32.totalorder %s66, %s68
      %p72 = scmp.eq.s32.totalorder %s18, 0
      %p73 = por %p71, %p72
      %p74 = scmp.ne.s32.totalorder %s66, %s68
      %p75 = scmp.eq.s32.totalorder %s23, 3
      %p76 = por %p74, %p75
      %p77 = scmp.ne.s32.totalorder %s68, %s69
      %p78 = scmp.eq.s32.totalorder %s23, 0
      %p79 = por %p77, %p78
      %p80 = scmp.ne.s32.totalorder %s68, %s69
      %p81 = scmp.eq.s32.totalorder %s24, 3
      %p82 = por %p80, %p81
      %p84 = scmp.ne.s32.totalorder %s69, %s83
      %p85 = scmp.eq.s32.totalorder %s24, 0
      %p86 = por %p84, %p85
      %s88 = sadd.s32 %s87, 1
      %p91 = scmp.eq.s32.totalorder %s18, 3
      %p92 = scmp.ne.s32.totalorder %s87, %s89
      %p93 = scmp.eq.s32.totalorder %s18, 0
      %p94 = por %p92, %p93
      %p95 = scmp.ne.s32.totalorder %s87, %s89
      %p96 = scmp.eq.s32.totalorder %s23, 3
      %p97 = por %p95, %p96
      %p98 = scmp.ne.s32.totalorder %s89, %s90
      %p99 = scmp.eq.s32.totalorder %s23, 0
      %p100 = por %p98, %p99
      %p101 = scmp.ne.s32.totalorder %s89, %s90
      %p102 = scmp.eq.s32.totalorder %s24, 3
      %p103 = por %p101, %p102
      %p105 = scmp.ne.s32.totalorder %s90, %s104
      %p106 = scmp.eq.s32.totalorder %s24, 0
      %p107 = por %p105, %p106
      %s109 = sadd.s32 %s108, 1
      %p112 = scmp.eq.s32.totalorder %s18, 3
      %p113 = scmp.ne.s32.totalorder %s108, %s110
      %p114 = scmp.eq.s32.totalorder %s18, 0
      %p115 = por %p113, %p114
      %p116 = scmp.ne.s32.totalorder %s108, %s110
      %p117 = scmp.eq.s32.totalorder %s23, 3
      %p118 = por %p116, %p117
      %p119 = scmp.ne.s32.totalorder %s110, %s111
      %p120 = scmp.eq.s32.totalorder %s23, 0
      %p121 = por %p119, %p120
      %p122 = scmp.ne.s32.totalorder %s110, %s111
      %p123 = scmp.eq.s32.totalorder %s24, 3
      %p124 = por %p122, %p123
      %p126 = scmp.ne.s32.totalorder %s111, %s125
      %p127 = scmp.eq.s32.totalorder %s24, 0
      %p128 = por %p126, %p127
      %s130 = sadd.s32 %s129, 1
      %p133 = scmp.eq.s32.totalorder %s18, 3
      %p134 = scmp.ne.s32.totalorder %s129, %s131
      %p135 = scmp.eq.s32.totalorder %s18, 0
      %p136 = por %p134, %p135
      %p137 = scmp.ne.s32.totalorder %s129, %s131
      %p138 = scmp.eq.s32.totalorder %s23, 3
      %p139 = por %p137, %p138
      %p140 = scmp.ne.s32.totalorder %s131, %s132
      %p141 = scmp.eq.s32.totalorder %s23, 0
      %p142 = por %p140, %p141
      %p143 = scmp.ne.s32.totalorder %s131, %s132
      %p144 = scmp.eq.s32.totalorder %s24, 3
      %p145 = por %p143, %p144
      %p147 = scmp.ne.s32.totalorder %s132, %s146
      %p148 = scmp.eq.s32.totalorder %s24, 0
      %p149 = por %p147, %p148
      %s150 = ssub.s32 %s25, %s37
      %p151 = scmp.eq.s32.totalorder %s150, 0
      %s153 = sadd.s32 %s152, 1
      %s154 = scalar_select %p151, %s152, %s153
      %p157 = pneg %p151
      %p158 = scmp.eq.s32.totalorder %s18, 3
      %p159 = por %p157, %p158
      %p160 = scmp.ne.s32.totalorder %s152, %s155
      %p161 = scmp.eq.s32.totalorder %s18, 0
      %p162 = por %p160, %p161
      %p163 = scmp.ne.s32.totalorder %s152, %s155
      %p164 = scmp.eq.s32.totalorder %s23, 3
      %p165 = por %p163, %p164
      %p166 = scmp.ne.s32.totalorder %s155, %s156
      %p167 = scmp.eq.s32.totalorder %s23, 0
      %p168 = por %p166, %p167
      %p169 = scmp.ne.s32.totalorder %s155, %s156
      %p170 = scmp.eq.s32.totalorder %s24, 3
      %p171 = por %p169, %p170
      %p173 = scmp.ne.s32.totalorder %s156, %s172
      %p174 = scmp.eq.s32.totalorder %s24, 0
      %p175 = por %p173, %p174
      %p176 = scmp.le.s32.totalorder 1, %s18
      %p177 = scmp.lt.s32.totalorder %s18, 5
      %p178 = pnand %p176, %p177
      %p179 = pneg %p178
      // Predicated region
      $region9: #{tpu_custom_call.1} parent=5 // pred_check
        _
      $region10: #{tpu_custom_call.1} parent=5 // pred_check_branch
        %181 = sbr.rel (%p178) target = $region12
      $region11: #{tpu_custom_call.1} parent=5 // pred_region
        %s182 = ssub.s32 %s18, 1
        // Predicated region
        $region13: #{tpu_custom_call.1} parent=11 // pred_check
          %p183 = pneg %p79
        $region14: #{tpu_custom_call.1} parent=11 // pred_check_branch
          %185 = sbr.rel (%p183) target = $region16
        $region15: #{tpu_custom_call.1} parent=11 // pred_region
          %s187 = ssub.s32 64, 64
          %188 = vsyncadd [#allocation7], %s187
          %s190 = sshll.u32 [#allocation6], 4
          %s191 = int_to_ptr.vmem [resolvable:$true] %s190
          %193 = dma.hbm_to_vmem [thread:$0]  %s1, 64, %s191, [#allocation7]
        $region16: #{tpu_custom_call.1} parent=11 // pred_fallthru
          _
        // Predicated region
        $region17: #{tpu_custom_call.1} parent=11 // pred_check
          %p194 = pneg %p100
        $region18: #{tpu_custom_call.1} parent=11 // pred_check_branch
          %196 = sbr.rel (%p194) target = $region20
        $region19: #{tpu_custom_call.1} parent=11 // pred_region
          _
        $region20: #{tpu_custom_call.1} parent=11 // pred_fallthru
          _
        // Predicated region
        $region21: #{tpu_custom_call.1} parent=11 // pred_check
          %p197 = pneg %p121
        $region22: #{tpu_custom_call.1} parent=11 // pred_check_branch
          %199 = sbr.rel (%p197) target = $region24
        $region23: #{tpu_custom_call.1} parent=11 // pred_region
          %s201 = ssub.s32 512, 512
          %202 = vsyncadd [#allocation7], %s201
          %s203 = sshll.u32 [#allocation8], 4
          %s204 = int_to_ptr.vmem [resolvable:$true] %s203
          %209 = dma.hbm_to_vmem [thread:$0]  %s3, 512, %s204, [#allocation7], 128, 128, 8
        $region24: #{tpu_custom_call.1} parent=11 // pred_fallthru
          _
        // Predicated region
        $region25: #{tpu_custom_call.1} parent=11 // pred_check
          %p210 = pneg %p142
        $region26: #{tpu_custom_call.1} parent=11 // pred_check_branch
          %212 = sbr.rel (%p210) target = $region28
        $region27: #{tpu_custom_call.1} parent=11 // pred_region
          _
        $region28: #{tpu_custom_call.1} parent=11 // pred_fallthru
          _
      $region12: #{tpu_custom_call.1} parent=5 // pred_fallthru
        _
      %p213 = scmp.lt.s32.totalorder %s18, 4
      // Predicated region
      $region29: #{tpu_custom_call.1} parent=5 // pred_check
        %p214 = pneg %p213
      $region30: #{tpu_custom_call.1} parent=5 // pred_check_branch
        %216 = sbr.rel (%p214) target = $region32
      $region31: #{tpu_custom_call.1} parent=5 // pred_region
        // Predicated region
        $region33: #{tpu_custom_call.1} parent=31 // pred_check
          %p217 = pneg %p52
        $region34: #{tpu_custom_call.1} parent=31 // pred_check_branch
          %219 = sbr.rel (%p217) target = $region36
        $region35: #{tpu_custom_call.1} parent=31 // pred_region
          %s220 = sand.u32 %s42, 1
          %s221 = scalar_lea.sflag [#allocation4], %s220
          %s222 = sand.u32 %s42, 1
          %s223 = smul.addr %s222, 4
          %s224 = scalar_lea.vmem [#allocation3], %s223
          %s226 = ssub.s32 64, 64
          %227 = vsyncadd %s221, %s226
          %s228 = smul.addr %s25, 2
          %s229 = sadd.s32 %s26, %s228
          %s230 = smul.addr %s229, 64
          %s231 = scalar_lea.hbm %s0, %s230
          %s233 = sshll.u32 %s224, 4
          %s234 = int_to_ptr.vmem [resolvable:$true] %s233
          %236 = dma.hbm_to_vmem [thread:$0]  %s231, 64, %s234, %s221
        $region36: #{tpu_custom_call.1} parent=31 // pred_fallthru
          _
      $region32: #{tpu_custom_call.1} parent=5 // pred_fallthru
        _
      %p237 = scmp.le.s32.totalorder 1, %s18
      %p238 = scmp.lt.s32.totalorder %s18, 5
      %p239 = pnand %p237, %p238
      %p240 = pneg %p239
      // Predicated region
      $region37: #{tpu_custom_call.1} parent=5 // pred_check
        _
      $region38: #{tpu_custom_call.1} parent=5 // pred_check_branch
        %242 = sbr.rel (%p239) target = $region40
      $region39: #{tpu_custom_call.1} parent=5 // pred_region
        %s243 = ssub.s32 %s18, 1
        %s244 = sand.u32 %s45, 1
        %s245 = scalar_lea.sflag [#allocation4], %s244
        %s246 = sand.u32 %s45, 1
        %s247 = smul.addr %s246, 4
        %s248 = scalar_lea.vmem [#allocation3], %s247
        // Predicated region
        $region41: #{tpu_custom_call.1} parent=39 // pred_check
          %p249 = pneg %p58
        $region42: #{tpu_custom_call.1} parent=39 // pred_check_branch
          %251 = sbr.rel (%p249) target = $region44
        $region43: #{tpu_custom_call.1} parent=39 // pred_region
          %252 = dma.done %s245, 64
        $region44: #{tpu_custom_call.1} parent=39 // pred_fallthru
          _
        // Predicated region
        $region45: #{tpu_custom_call.1} parent=39 // pred_check
          %p253 = pneg %p79
        $region46: #{tpu_custom_call.1} parent=39 // pred_check_branch
          %255 = sbr.rel (%p253) target = $region48
        $region47: #{tpu_custom_call.1} parent=39 // pred_region
          %256 = dma.done [#allocation7], 64
        $region48: #{tpu_custom_call.1} parent=39 // pred_fallthru
          _
        // Predicated region
        $region49: #{tpu_custom_call.1} parent=39 // pred_check
          %p257 = pneg %p121
        $region50: #{tpu_custom_call.1} parent=39 // pred_check_branch
          %259 = sbr.rel (%p257) target = $region52
        $region51: #{tpu_custom_call.1} parent=39 // pred_region
          %260 = dma.done [#allocation7], 512
        $region52: #{tpu_custom_call.1} parent=39 // pred_fallthru
          _
        %s261 = sand.u32 %s45, 1
        %s262 = scalar_lea.sflag [#allocation4], %s261
        %s263 = sand.u32 %s45, 1
        %s264 = smul.addr %s263, 4
        %s265 = scalar_lea.vmem [#allocation3], %s264
        %p266 = pneg %p58
        %p267 = pneg %p55
        %p268 = pneg %p79
        %p269 = pneg %p76
        %p270 = pneg %p100
        %p271 = pneg %p97
        %p272 = pneg %p121
        %p273 = pneg %p118
        %p274 = pneg %p142
        %p275 = pneg %p139
        %p276 = pneg %p168
        %p277 = pneg %p165
        %s278 = sand.u32 %s155, 1
        %s279 = scalar_lea.sflag [#allocation5], %s278
        %s280 = sand.u32 %s155, 1
        %s281 = scalar_lea.vmem [#allocation9], %s280
        %p282 = scmp.eq.s32.totalorder %s28, 0
        // Predicated region
        $region53: #{tpu_custom_call.1} parent=39 // pred_check
          %p283 = pneg %p282
        $region54: #{tpu_custom_call.1} parent=39 // pred_check_branch
          %285 = sbr.rel (%p283) target = $region56
        $region55: #{tpu_custom_call.1} parent=39 // pred_region
          %286 = vst [vmem:[#allocation2] sm:$0xf] 0.0
        $region56: #{tpu_custom_call.1} parent=39 // pred_fallthru
          _
        %v287 = vld [vmem:[#allocation2] sm:$0xf]
        %v288 = vld [vmem:[%s248] sm:$0xf]
        %v289 = vadd.f32 %v287, %v288
        %290 = vst [vmem:[#allocation2] sm:$0xf] %v289
        %p291 = scmp.eq.s32.totalorder %s28, 1
        // Predicated region
        $region57: #{tpu_custom_call.1} parent=39 // pred_check
          %p292 = pneg %p291
        $region58: #{tpu_custom_call.1} parent=39 // pred_check_branch
          %294 = sbr.rel (%p292) target = $region60
        $region59: #{tpu_custom_call.1} parent=39 // pred_region
          %v295 = vld [vmem:[#allocation2] sm:$0xf]
          %vm296 = vcmask 1043456
          %v297 = vsel %vm296, %v295, 0.0
          %298 = vadd.xlane.f32.xlu0 %v297
          %v299 = vpop.xlane.xlu0 %298
          %v300 = vmul.f32 %v299, 0.00390625
          %v301 = vld [vmem:[#allocation6] sm:$0xf]
          %v302 = vld [vmem:[%s2] sm:$0x1]
          %v304 = vlaneseq
          %v305 = vand.u32 %v304, 127
          %v306 = vlaneseq
          %v307 = vshrl.u32 %v306, 7
          %v308 = vsub.s32 %v305, %v307
          %v309 = vrot.slane %v300, %v308
          %vm310 = vcmask 31744
          %v311 = vsel %vm310, %v309, 0
          %v314 = vsel %vm296, %v301, 0
          %316 = vmatprep.subr.mxu0 0.0
          %317 = vmatpush1.msra.mxu0 %v314
          %318 = vmatprep.subr.mxu0 0.0
          %319 = vmatpush1.msra.mxu0 0.0
          %320 = vmatprep.subr.mxu0 0.0
          %321 = vmatpush1.msra.mxu0 0.0
          %322 = vmatprep.subr.mxu0 0.0
          %323 = vmatpush1.msra.mxu0 0.0
          %324 = vmatprep.subr.mxu0 0.0
          %325 = vmatpush1.msra.mxu0 0.0
          %326 = vmatprep.subr.mxu0 0.0
          %327 = vmatpush1.msra.mxu0 0.0
          %328 = vmatprep.subr.mxu0 0.0
          %329 = vmatpush1.msra.mxu0 0.0
          %330 = vmatprep.subr.mxu0 0.0
          %331 = vmatpush1.msra.mxu0 0.0
          %332 = vmatprep.subr.mxu0 0.0
          %333 = vmatpush1.msra.mxu0 0.0
          %334 = vmatprep.subr.mxu0 0.0
          %335 = vmatpush1.msra.mxu0 0.0
          %336 = vmatprep.subr.mxu0 0.0
          %337 = vmatpush1.msra.mxu0 0.0
          %338 = vmatprep.subr.mxu0 0.0
          %339 = vmatpush1.msra.mxu0 0.0
          %340 = vmatprep.subr.mxu0 0.0
          %341 = vmatpush1.msra.mxu0 0.0
          %342 = vmatprep.subr.mxu0 0.0
          %343 = vmatpush1.msra.mxu0 0.0
          %344 = vmatprep.subr.mxu0 0.0
          %345 = vmatpush1.msra.mxu0 0.0
          %346 = vmatprep.subr.mxu0 0.0
          %347 = vmatpush1.msra.mxu0 0.0
          %348 = vmatprep.subr.mxu0 0.0
          %349 = vmatpush1.msra.mxu0 0.0
          %350 = vmatprep.subr.mxu0 0.0
          %351 = vmatpush1.msra.mxu0 0.0
          %352 = vmatprep.subr.mxu0 0.0
          %353 = vmatpush1.msra.mxu0 0.0
          %354 = vmatprep.subr.mxu0 0.0
          %355 = vmatpush1.msra.mxu0 0.0
          %356 = vmatprep.subr.mxu0 0.0
          %357 = vmatpush1.msra.mxu0 0.0
          %358 = vmatprep.subr.mxu0 0.0
          %359 = vmatpush1.msra.mxu0 0.0
          %360 = vmatprep.subr.mxu0 0.0
          %361 = vmatpush1.msra.mxu0 0.0
          %362 = vmatprep.subr.mxu0 0.0
          %363 = vmatpush1.msra.mxu0 0.0
          %364 = vmatprep.subr.mxu0 0.0
          %365 = vmatpush1.msra.mxu0 0.0
          %366 = vmatprep.subr.mxu0 0.0
          %367 = vmatpush1.msra.mxu0 0.0
          %368 = vmatprep.subr.mxu0 0.0
          %369 = vmatpush1.msra.mxu0 0.0
          %370 = vmatprep.subr.mxu0 0.0
          %371 = vmatpush1.msra.mxu0 0.0
          %372 = vmatprep.subr.mxu0 0.0
          %373 = vmatpush1.msra.mxu0 0.0
          %374 = vmatprep.subr.mxu0 0.0
          %375 = vmatpush1.msra.mxu0 0.0
          %376 = vmatprep.subr.mxu0 0.0
          %377 = vmatpush1.msra.mxu0 0.0
          %378 = vmatprep.subr.mxu0 0.0
          %379 = vmatpush1.msra.mxu0 0.0
          %380 = vmatprep.mubr.f32.mxu0 0.0
          %381 = vmatmul.mubr.f32.gmra.mrb[0].mxu0 %v311
          %v382 = vpop.f32.mrb[0].mxu0
          %v383 = vadd.f32 %v302, %v382
          %v384 = vpop.f32.mrb[0].mxu0
          %385 = vdwg.mxu0
          %v386 = vmax.f32 %v383, 0.0
          %v387 = vld [vmem:[#allocation8] sm:$0xff]
          %v388 = vld [vmem:[#allocation8 + $0x8] sm:$0xff]
          %v389 = vld [vmem:[#allocation8 + $0x10] sm:$0xff]
          %v390 = vld [vmem:[#allocation8 + $0x18] sm:$0xff]
          %v391 = vld [vmem:[%s4] sm:$0x1]
          %vm392 = vcmask 261120
          %v394 = vsel %vm392, %v386, 0
          %396 = vmatprep.subr.mxu0 0.0
          %397 = vmatpush1.msra.mxu0 %v387
          %398 = vmatprep.subr.mxu0 0.0
          %399 = vmatpush1.msra.mxu0 %v388
          %400 = vmatprep.subr.mxu0 0.0
          %401 = vmatpush1.msra.mxu0 %v389
          %402 = vmatprep.subr.mxu0 0.0
          %403 = vmatpush1.msra.mxu0 %v390
          %404 = vmatprep.subr.mxu0 0.0
          %405 = vmatpush1.msra.mxu0 0.0
          %406 = vmatprep.subr.mxu0 0.0
          %407 = vmatpush1.msra.mxu0 0.0
          %408 = vmatprep.subr.mxu0 0.0
          %409 = vmatpush1.msra.mxu0 0.0
          %410 = vmatprep.subr.mxu0 0.0
          %411 = vmatpush1.msra.mxu0 0.0
          %412 = vmatprep.subr.mxu0 0.0
          %413 = vmatpush1.msra.mxu0 0.0
          %414 = vmatprep.subr.mxu0 0.0
          %415 = vmatpush1.msra.mxu0 0.0
          %416 = vmatprep.subr.mxu0 0.0
          %417 = vmatpush1.msra.mxu0 0.0
          %418 = vmatprep.subr.mxu0 0.0
          %419 = vmatpush1.msra.mxu0 0.0
          %420 = vmatprep.subr.mxu0 0.0
          %421 = vmatpush1.msra.mxu0 0.0
          %422 = vmatprep.subr.mxu0 0.0
          %423 = vmatpush1.msra.mxu0 0.0
          %424 = vmatprep.subr.mxu0 0.0
          %425 = vmatpush1.msra.mxu0 0.0
          %426 = vmatprep.subr.mxu0 0.0
          %427 = vmatpush1.msra.mxu0 0.0
          %428 = vmatprep.subr.mxu0 0.0
          %429 = vmatpush1.msra.mxu0 0.0
          %430 = vmatprep.subr.mxu0 0.0
          %431 = vmatpush1.msra.mxu0 0.0
          %432 = vmatprep.subr.mxu0 0.0
          %433 = vmatpush1.msra.mxu0 0.0
          %434 = vmatprep.subr.mxu0 0.0
          %435 = vmatpush1.msra.mxu0 0.0
          %436 = vmatprep.subr.mxu0 0.0
          %437 = vmatpush1.msra.mxu0 0.0
          %438 = vmatprep.subr.mxu0 0.0
          %439 = vmatpush1.msra.mxu0 0.0
          %440 = vmatprep.subr.mxu0 0.0
          %441 = vmatpush1.msra.mxu0 0.0
          %442 = vmatprep.subr.mxu0 0.0
          %443 = vmatpush1.msra.mxu0 0.0
          %444 = vmatprep.subr.mxu0 0.0
          %445 = vmatpush1.msra.mxu0 0.0
          %446 = vmatprep.subr.mxu0 0.0
          %447 = vmatpush1.msra.mxu0 0.0
          %448 = vmatprep.subr.mxu0 0.0
          %449 = vmatpush1.msra.mxu0 0.0
          %450 = vmatprep.subr.mxu0 0.0
          %451 = vmatpush1.msra.mxu0 0.0
          %452 = vmatprep.subr.mxu0 0.0
          %453 = vmatpush1.msra.mxu0 0.0
          %454 = vmatprep.subr.mxu0 0.0
          %455 = vmatpush1.msra.mxu0 0.0
          %456 = vmatprep.subr.mxu0 0.0
          %457 = vmatpush1.msra.mxu0 0.0
          %458 = vmatprep.subr.mxu0 0.0
          %459 = vmatpush1.msra.mxu0 0.0
          %460 = vmatprep.mubr.f32.mxu0 0.0
          %461 = vmatmul.mubr.f32.gmra.mrb[0].mxu0 %v394
          %v462 = vpop.f32.mrb[0].mxu0
          %v463 = vadd.f32 %v391, %v462
          %v464 = vpop.f32.mrb[0].mxu0
          %465 = vdwg.mxu0
          %466 = vst [vmem:[%s281] sm:$0x1] %v463
        $region60: #{tpu_custom_call.1} parent=39 // pred_fallthru
          _
        %s467 = sand.u32 %s155, 1
        %s468 = scalar_lea.sflag [#allocation5], %s467
        %s469 = sand.u32 %s155, 1
        %s470 = scalar_lea.vmem [#allocation9], %s469
        // Predicated region
        $region61: #{tpu_custom_call.1} parent=39 // pred_check
          %p471 = pneg %p165
        $region62: #{tpu_custom_call.1} parent=39 // pred_check_branch
          %473 = sbr.rel (%p471) target = $region64
        $region63: #{tpu_custom_call.1} parent=39 // pred_region
          %s475 = ssub.s32 16, 16
          %476 = vsyncadd %s468, %s475
          %s477 = smul.addr %s27, 16
          %s478 = scalar_lea.hbm %s5, %s477
          %s480 = sshll.u32 %s470, 4
          %s481 = int_to_ptr.vmem [resolvable:$true] %s480
          %483 = dma.vmem_to_hbm [thread:$0]  %s481, 16, %s478, %s468
        $region64: #{tpu_custom_call.1} parent=39 // pred_fallthru
          _
      $region40: #{tpu_custom_call.1} parent=5 // pred_fallthru
        _
      %p484 = scmp.le.s32.totalorder 2, %s18
      // Predicated region
      $region65: #{tpu_custom_call.1} parent=5 // pred_check
        %p485 = pneg %p484
      $region66: #{tpu_custom_call.1} parent=5 // pred_check_branch
        %487 = sbr.rel (%p485) target = $region68
      $region67: #{tpu_custom_call.1} parent=5 // pred_region
        %s488 = ssub.s32 %s18, 2
        // Predicated region
        $region69: #{tpu_custom_call.1} parent=67 // pred_check
          %p489 = pneg %p171
        $region70: #{tpu_custom_call.1} parent=67 // pred_check_branch
          %491 = sbr.rel (%p489) target = $region72
        $region71: #{tpu_custom_call.1} parent=67 // pred_region
          %s492 = sand.u32 %s156, 1
          %s493 = scalar_lea.sflag [#allocation5], %s492
          %s494 = sand.u32 %s156, 1
          %s495 = scalar_lea.vmem [#allocation9], %s494
          %496 = dma.done %s493, 16
        $region72: #{tpu_custom_call.1} parent=67 // pred_fallthru
          _
      $region68: #{tpu_custom_call.1} parent=5 // pred_fallthru
        _
    $region6: #{tpu_custom_call.1} parent=1 // loop_footer
      %s22 = sadd.s32 1, %s18
    $region7: #{tpu_custom_call.1} parent=1 // loop_footer_branch
      %17 = sbr.rel target = $region3
    $region8: #{tpu_custom_call.1} parent=1 // loop_exit
      _
    %497 = vsyncpa [#allocation4], 1
    %s498 = scalar_lea.sflag [#allocation4], 1
    %499 = vsyncpa %s498, 1
    %500 = vsyncpa [#allocation7], 1
    %501 = vsyncpa [#allocation5], 1
    %s502 = scalar_lea.sflag [#allocation5], 1
    %503 = vsyncpa %s502, 1

// kernel: tpu_custom_call.1
$region0: #{tpu_custom_call.1}
  #allocation0 [shape = 'u32[]', space=smem, size = 0x4, offset = 0x4, fixed_abs, tag = 'smem constant byte address 0x4 - core index']
  #allocation1 [shape = 'u32[144,128]{1,0:T(1,128)}', space=vmem, size = 0x12000, scoped, tag = 'internal scratch']
  #allocation2 [shape = 'f32[1,4,128]{2,1,0:T(4,128)}', space=vmem, size = 0x800, scoped, tag = 'scratch operand']
  %s0 = inlined_call_operand.hbm [shape: f32[2,4,256], index: 0, kind: input, shape index: {}]
  %s1 = inlined_call_operand.hbm [shape: f32[4,32], index: 1, kind: input, shape index: {}]
  %s2 = inlined_call_operand.vmem [shape: f32[1,32], index: 2, kind: input, shape index: {}]
  %s3 = inlined_call_operand.hbm [shape: f32[32,128], index: 3, kind: input, shape index: {}]
  %s4 = inlined_call_operand.vmem [shape: f32[1,128], index: 4, kind: input, shape index: {}]
  %s5 = inlined_call_operand.hbm [shape: f32[2,1,128], index: 5, kind: output, shape index: {}]
  %s6 = sld [smem:[#allocation0]]
  $region73: #{tpu_custom_call.1} parent=0
    _
  %s8 = ssub.s32 1, %s6
  %s9 = scalar_select 0, %s8, %s6
  $region1: #{tpu_custom_call.1} parent=0
    #allocation3 [shape = 'u8[4096]{0}', space=vmem, size = 0x1000, scoped, tag = 'input window, operand 0']
    #allocation4 [shape = 's32[2]{0}', space=sflag, size = 0x8, scoped, tag = 'scoped memory for tpu_custom_call.1']
    #allocation5 [shape = 's32[2]{0}', space=sflag, size = 0x8, scoped, tag = 'scoped memory for tpu_custom_call.1']
    #allocation6 [shape = 'u8[2048]{0}', space=vmem, size = 0x800, scoped, tag = 'input window, operand 1, single buffered']
    #allocation7 [shape = 's32[1]{0}', space=sflag, size = 0x4, scoped, tag = 'scoped memory for tpu_custom_call.1']
    #allocation8 [shape = 'u8[16384]{0}', space=vmem, size = 0x4000, scoped, tag = 'input window, operand 3, single buffered']
    #allocation9 [shape = 'u8[1024]{0}', space=vmem, size = 0x400, scoped, tag = 'output window, operand 0']
    %10 = vsyncpa [#allocation4], 0
    %s11 = scalar_lea.sflag [#allocation4], 1
    %12 = vsyncpa %s11, 0
    %13 = vsyncpa [#allocation7], 0
    %14 = vsyncpa [#allocation5], 0
    %s15 = scalar_lea.sflag [#allocation5], 1
    %16 = vsyncpa %s15, 0
    loop: start=0, step=1, limit=6
    $region2: #{tpu_custom_call.1} parent=1 // loop_pre_header
      _
    $region3: #{tpu_custom_call.1} parent=1 // loop_header
      %s18 = sphi 0, %s22
      %p19 = scmp.ge.s32.totalorder %s18, 6
      %s25 = sphi 0, %s37
      %s26 = sphi 0, %s33
      %s27 = sphi 0, %s25
      %s28 = sphi 0, %s26
      %s29 = sphi 0, %s27
      %s30 = sphi 0, %s28
      %s42 = sphi 0, %s44
      %s45 = sphi 0, %s42
      %s46 = sphi 0, %s45
      %s62 = sphi 0, %s46
      %s66 = sphi 0, %s66
      %s68 = sphi 0, %s66
      %s69 = sphi 0, %s68
      %s83 = sphi 0, %s69
      %s87 = sphi 0, %s87
      %s89 = sphi 0, %s87
      %s90 = sphi 0, %s89
      %s104 = sphi 0, %s90
      %s108 = sphi 0, %s108
      %s110 = sphi 0, %s108
      %s111 = sphi 0, %s110
      %s125 = sphi 0, %s111
      %s129 = sphi 0, %s129
      %s131 = sphi 0, %s129
      %s132 = sphi 0, %s131
      %s146 = sphi 0, %s132
      %s152 = sphi 0, %s154
      %s155 = sphi 0, %s152
      %s156 = sphi 0, %s155
      %s172 = sphi 0, %s156
    $region4: #{tpu_custom_call.1} parent=1 // loop_header_branch
      %21 = sbr.rel (%p19) target = $region8
    $region5: #{tpu_custom_call.1} parent=1 // loop_body
      %s23 = ssub.s32 %s18, 1
      %s24 = ssub.s32 %s18, 2
      %s31 = sadd.s32 1, %s26
      %p32 = scmp.ge.s32.totalorder %s31, 2
      %s33 = scalar_select %p32, 0, %s31
      %s34 = sadd.s32 1, %s25
      %s35 = scalar_select %p32, %s34, %s25
      %p36 = scmp.ge.s32.totalorder %s35, 2
      %s37 = scalar_select %p36, 0, %s35
      %s38 = ssub.s32 %s25, %s37
      %s39 = ssub.s32 %s26, %s33
      %s40 = sor.u32 %s38, %s39
      %p41 = scmp.eq.s32.totalorder %s40, 0
      %s43 = sadd.s32 %s42, 1
      %s44 = scalar_select %p41, %s42, %s43
      %p47 = pneg %p41
      %p48 = scmp.eq.s32.totalorder %s18, 3
      %p49 = por %p47, %p48
      %p50 = scmp.ne.s32.totalorder %s42, %s45
      %p51 = scmp.eq.s32.totalorder %s18, 0
      %p52 = por %p50, %p51
      %p53 = scmp.ne.s32.totalorder %s42, %s45
      %p54 = scmp.eq.s32.totalorder %s23, 3
      %p55 = por %p53, %p54
      %p56 = scmp.ne.s32.totalorder %s45, %s46
      %p57 = scmp.eq.s32.totalorder %s23, 0
      %p58 = por %p56, %p57
      %p59 = scmp.ne.s32.totalorder %s45, %s46
      %p60 = scmp.eq.s32.totalorder %s24, 3
      %p61 = por %p59, %p60
      %p63 = scmp.ne.s32.totalorder %s46, %s62
      %p64 = scmp.eq.s32.totalorder %s24, 0
      %p65 = por %p63, %p64
      %s67 = sadd.s32 %s66, 1
      %p70 = scmp.eq.s32.totalorder %s18, 3
      %p71 = scmp.ne.s32.totalorder %s66, %s68
      %p72 = scmp.eq.s32.totalorder %s18, 0
      %p73 = por %p71, %p72
      %p74 = scmp.ne.s32.totalorder %s66, %s68
      %p75 = scmp.eq.s32.totalorder %s23, 3
      %p76 = por %p74, %p75
      %p77 = scmp.ne.s32.totalorder %s68, %s69
      %p78 = scmp.eq.s32.totalorder %s23, 0
      %p79 = por %p77, %p78
      %p80 = scmp.ne.s32.totalorder %s68, %s69
      %p81 = scmp.eq.s32.totalorder %s24, 3
      %p82 = por %p80, %p81
      %p84 = scmp.ne.s32.totalorder %s69, %s83
      %p85 = scmp.eq.s32.totalorder %s24, 0
      %p86 = por %p84, %p85
      %s88 = sadd.s32 %s87, 1
      %p91 = scmp.eq.s32.totalorder %s18, 3
      %p92 = scmp.ne.s32.totalorder %s87, %s89
      %p93 = scmp.eq.s32.totalorder %s18, 0
      %p94 = por %p92, %p93
      %p95 = scmp.ne.s32.totalorder %s87, %s89
      %p96 = scmp.eq.s32.totalorder %s23, 3
      %p97 = por %p95, %p96
      %p98 = scmp.ne.s32.totalorder %s89, %s90
      %p99 = scmp.eq.s32.totalorder %s23, 0
      %p100 = por %p98, %p99
      %p101 = scmp.ne.s32.totalorder %s89, %s90
      %p102 = scmp.eq.s32.totalorder %s24, 3
      %p103 = por %p101, %p102
      %p105 = scmp.ne.s32.totalorder %s90, %s104
      %p106 = scmp.eq.s32.totalorder %s24, 0
      %p107 = por %p105, %p106
      %s109 = sadd.s32 %s108, 1
      %p112 = scmp.eq.s32.totalorder %s18, 3
      %p113 = scmp.ne.s32.totalorder %s108, %s110
      %p114 = scmp.eq.s32.totalorder %s18, 0
      %p115 = por %p113, %p114
      %p116 = scmp.ne.s32.totalorder %s108, %s110
      %p117 = scmp.eq.s32.totalorder %s23, 3
      %p118 = por %p116, %p117
      %p119 = scmp.ne.s32.totalorder %s110, %s111
      %p120 = scmp.eq.s32.totalorder %s23, 0
      %p121 = por %p119, %p120
      %p122 = scmp.ne.s32.totalorder %s110, %s111
      %p123 = scmp.eq.s32.totalorder %s24, 3
      %p124 = por %p122, %p123
      %p126 = scmp.ne.s32.totalorder %s111, %s125
      %p127 = scmp.eq.s32.totalorder %s24, 0
      %p128 = por %p126, %p127
      %s130 = sadd.s32 %s129, 1
      %p133 = scmp.eq.s32.totalorder %s18, 3
      %p134 = scmp.ne.s32.totalorder %s129, %s131
      %p135 = scmp.eq.s32.totalorder %s18, 0
      %p136 = por %p134, %p135
      %p137 = scmp.ne.s32.totalorder %s129, %s131
      %p138 = scmp.eq.s32.totalorder %s23, 3
      %p139 = por %p137, %p138
      %p140 = scmp.ne.s32.totalorder %s131, %s132
      %p141 = scmp.eq.s32.totalorder %s23, 0
      %p142 = por %p140, %p141
      %p143 = scmp.ne.s32.totalorder %s131, %s132
      %p144 = scmp.eq.s32.totalorder %s24, 3
      %p145 = por %p143, %p144
      %p147 = scmp.ne.s32.totalorder %s132, %s146
      %p148 = scmp.eq.s32.totalorder %s24, 0
      %p149 = por %p147, %p148
      %s150 = ssub.s32 %s25, %s37
      %p151 = scmp.eq.s32.totalorder %s150, 0
      %s153 = sadd.s32 %s152, 1
      %s154 = scalar_select %p151, %s152, %s153
      %p157 = pneg %p151
      %p158 = scmp.eq.s32.totalorder %s18, 3
      %p159 = por %p157, %p158
      %p160 = scmp.ne.s32.totalorder %s152, %s155
      %p161 = scmp.eq.s32.totalorder %s18, 0
      %p162 = por %p160, %p161
      %p163 = scmp.ne.s32.totalorder %s152, %s155
      %p164 = scmp.eq.s32.totalorder %s23, 3
      %p165 = por %p163, %p164
      %p166 = scmp.ne.s32.totalorder %s155, %s156
      %p167 = scmp.eq.s32.totalorder %s23, 0
      %p168 = por %p166, %p167
      %p169 = scmp.ne.s32.totalorder %s155, %s156
      %p170 = scmp.eq.s32.totalorder %s24, 3
      %p171 = por %p169, %p170
      %p173 = scmp.ne.s32.totalorder %s156, %s172
      %p174 = scmp.eq.s32.totalorder %s24, 0
      %p175 = por %p173, %p174
      %p176 = scmp.le.s32.totalorder 1, %s18
      %p177 = scmp.lt.s32.totalorder %s18, 5
      %p178 = pnand %p176, %p177
      %p179 = pneg %p178
      // Predicated region
      $region9: #{tpu_custom_call.1} parent=5 // pred_check
        _
      $region10: #{tpu_custom_call.1} parent=5 // pred_check_branch
        %181 = sbr.rel (%p178) target = $region12
      $region11: #{tpu_custom_call.1} parent=5 // pred_region
        %s182 = ssub.s32 %s18, 1
        // Predicated region
        $region13: #{tpu_custom_call.1} parent=11 // pred_check
          %p183 = pneg %p79
        $region14: #{tpu_custom_call.1} parent=11 // pred_check_branch
          %185 = sbr.rel (%p183) target = $region16
        $region15: #{tpu_custom_call.1} parent=11 // pred_region
          %s187 = ssub.s32 64, 64
          %188 = vsyncadd [#allocation7], %s187
          %s190 = sshll.u32 [#allocation6], 4
          %s191 = int_to_ptr.vmem [resolvable:$true] %s190
          %193 = dma.hbm_to_vmem [thread:$0]  %s1, 64, %s191, [#allocation7]
        $region16: #{tpu_custom_call.1} parent=11 // pred_fallthru
          _
        // Predicated region
        $region17: #{tpu_custom_call.1} parent=11 // pred_check
          %p194 = pneg %p100
        $region18: #{tpu_custom_call.1} parent=11 // pred_check_branch
          %196 = sbr.rel (%p194) target = $region20
        $region19: #{tpu_custom_call.1} parent=11 // pred_region
          _
        $region20: #{tpu_custom_call.1} parent=11 // pred_fallthru
          _
        // Predicated region
        $region21: #{tpu_custom_call.1} parent=11 // pred_check
          %p197 = pneg %p121
        $region22: #{tpu_custom_call.1} parent=11 // pred_check_branch
          %199 = sbr.rel (%p197) target = $region24
        $region23: #{tpu_custom_call.1} parent=11 // pred_region
          %s201 = ssub.s32 512, 512
          %202 = vsyncadd [#allocation7], %s201
          %s203 = sshll.u32 [#allocation8], 4
          %s204 = int_to_ptr.vmem [resolvable:$true] %s203
          %209 = dma.hbm_to_vmem [thread:$0]  %s3, 512, %s204, [#allocation7], 128, 128, 8
        $region24: #{tpu_custom_call.1} parent=11 // pred_fallthru
          _
        // Predicated region
        $region25: #{tpu_custom_call.1} parent=11 // pred_check
          %p210 = pneg %p142
        $region26: #{tpu_custom_call.1} parent=11 // pred_check_branch
          %212 = sbr.rel (%p210) target = $region28
        $region27: #{tpu_custom_call.1} parent=11 // pred_region
          _
        $region28: #{tpu_custom_call.1} parent=11 // pred_fallthru
          _
      $region12: #{tpu_custom_call.1} parent=5 // pred_fallthru
        _
      %p213 = scmp.lt.s32.totalorder %s18, 4
      // Predicated region
      $region29: #{tpu_custom_call.1} parent=5 // pred_check
        %p214 = pneg %p213
      $region30: #{tpu_custom_call.1} parent=5 // pred_check_branch
        %216 = sbr.rel (%p214) target = $region32
      $region31: #{tpu_custom_call.1} parent=5 // pred_region
        // Predicated region
        $region33: #{tpu_custom_call.1} parent=31 // pred_check
          %p217 = pneg %p52
        $region34: #{tpu_custom_call.1} parent=31 // pred_check_branch
          %219 = sbr.rel (%p217) target = $region36
        $region35: #{tpu_custom_call.1} parent=31 // pred_region
          %s220 = sand.u32 %s42, 1
          %s221 = scalar_lea.sflag [#allocation4], %s220
          %s222 = sand.u32 %s42, 1
          %s223 = smul.addr %s222, 4
          %s224 = scalar_lea.vmem [#allocation3], %s223
          %s226 = ssub.s32 64, 64
          %227 = vsyncadd %s221, %s226
          %s228 = smul.addr %s25, 2
          %s229 = sadd.s32 %s26, %s228
          %s230 = smul.addr %s229, 64
          %s231 = scalar_lea.hbm %s0, %s230
          %s233 = sshll.u32 %s224, 4
          %s234 = int_to_ptr.vmem [resolvable:$true] %s233
          %236 = dma.hbm_to_vmem [thread:$0]  %s231, 64, %s234, %s221
        $region36: #{tpu_custom_call.1} parent=31 // pred_fallthru
          _
      $region32: #{tpu_custom_call.1} parent=5 // pred_fallthru
        _
      %p237 = scmp.le.s32.totalorder 1, %s18
      %p238 = scmp.lt.s32.totalorder %s18, 5
      %p239 = pnand %p237, %p238
      %p240 = pneg %p239
      // Predicated region
      $region37: #{tpu_custom_call.1} parent=5 // pred_check
        _
      $region38: #{tpu_custom_call.1} parent=5 // pred_check_branch
        %242 = sbr.rel (%p239) target = $region40
      $region39: #{tpu_custom_call.1} parent=5 // pred_region
        %s243 = ssub.s32 %s18, 1
        %s244 = sand.u32 %s45, 1
        %s245 = scalar_lea.sflag [#allocation4], %s244
        %s246 = sand.u32 %s45, 1
        %s247 = smul.addr %s246, 4
        %s248 = scalar_lea.vmem [#allocation3], %s247
        // Predicated region
        $region41: #{tpu_custom_call.1} parent=39 // pred_check
          %p249 = pneg %p58
        $region42: #{tpu_custom_call.1} parent=39 // pred_check_branch
          %251 = sbr.rel (%p249) target = $region44
        $region43: #{tpu_custom_call.1} parent=39 // pred_region
          %252 = dma.done %s245, 64
        $region44: #{tpu_custom_call.1} parent=39 // pred_fallthru
          _
        // Predicated region
        $region45: #{tpu_custom_call.1} parent=39 // pred_check
          %p253 = pneg %p79
        $region46: #{tpu_custom_call.1} parent=39 // pred_check_branch
          %255 = sbr.rel (%p253) target = $region48
        $region47: #{tpu_custom_call.1} parent=39 // pred_region
          %256 = dma.done [#allocation7], 64
        $region48: #{tpu_custom_call.1} parent=39 // pred_fallthru
          _
        // Predicated region
        $region49: #{tpu_custom_call.1} parent=39 // pred_check
          %p257 = pneg %p121
        $region50: #{tpu_custom_call.1} parent=39 // pred_check_branch
          %259 = sbr.rel (%p257) target = $region52
        $region51: #{tpu_custom_call.1} parent=39 // pred_region
          %260 = dma.done [#allocation7], 512
        $region52: #{tpu_custom_call.1} parent=39 // pred_fallthru
          _
        %s261 = sand.u32 %s45, 1
        %s262 = scalar_lea.sflag [#allocation4], %s261
        %s263 = sand.u32 %s45, 1
        %s264 = smul.addr %s263, 4
        %s265 = scalar_lea.vmem [#allocation3], %s264
        %p266 = pneg %p58
        %p267 = pneg %p55
        %p268 = pneg %p79
        %p269 = pneg %p76
        %p270 = pneg %p100
        %p271 = pneg %p97
        %p272 = pneg %p121
        %p273 = pneg %p118
        %p274 = pneg %p142
        %p275 = pneg %p139
        %p276 = pneg %p168
        %p277 = pneg %p165
        %s278 = sand.u32 %s155, 1
        %s279 = scalar_lea.sflag [#allocation5], %s278
        %s280 = sand.u32 %s155, 1
        %s281 = scalar_lea.vmem [#allocation9], %s280
        %p282 = scmp.eq.s32.totalorder %s28, 0
        // Predicated region
        $region53: #{tpu_custom_call.1} parent=39 // pred_check
          %p283 = pneg %p282
        $region54: #{tpu_custom_call.1} parent=39 // pred_check_branch
          %285 = sbr.rel (%p283) target = $region56
        $region55: #{tpu_custom_call.1} parent=39 // pred_region
          %286 = vst [vmem:[#allocation2] sm:$0xf] 0.0
        $region56: #{tpu_custom_call.1} parent=39 // pred_fallthru
          _
        %v287 = vld [vmem:[#allocation2] sm:$0xf]
        %v288 = vld [vmem:[%s248] sm:$0xf]
        %v289 = vadd.f32 %v287, %v288
        %290 = vst [vmem:[#allocation2] sm:$0xf] %v289
        %p291 = scmp.eq.s32.totalorder %s28, 1
        // Predicated region
        $region57: #{tpu_custom_call.1} parent=39 // pred_check
          %p292 = pneg %p291
        $region58: #{tpu_custom_call.1} parent=39 // pred_check_branch
          %294 = sbr.rel (%p292) target = $region60
        $region59: #{tpu_custom_call.1} parent=39 // pred_region
          %v295 = vld [vmem:[#allocation2] sm:$0xf]
          %vm296 = vcmask 1043456
          %v297 = vsel %vm296, %v295, 0.0
          %298 = vadd.xlane.f32.xlu0 %v297
          %v299 = vpop.xlane.xlu0 %298
          %v300 = vmul.f32 %v299, 0.00390625
          %v301 = vld [vmem:[#allocation6] sm:$0xf]
          %v302 = vld [vmem:[%s2] sm:$0x1]
          %v304 = vlaneseq
          %v305 = vand.u32 %v304, 127
          %v306 = vlaneseq
          %v307 = vshrl.u32 %v306, 7
          %v308 = vsub.s32 %v305, %v307
          %v309 = vrot.slane %v300, %v308
          %vm310 = vcmask 31744
          %v311 = vsel %vm310, %v309, 0
          %v314 = vsel %vm296, %v301, 0
          %316 = vmatprep.subr.mxu0 0.0
          %317 = vmatpush1.msra.mxu0 %v314
          %318 = vmatprep.subr.mxu0 0.0
          %319 = vmatpush1.msra.mxu0 0.0
          %320 = vmatprep.subr.mxu0 0.0
          %321 = vmatpush1.msra.mxu0 0.0
          %322 = vmatprep.subr.mxu0 0.0
          %323 = vmatpush1.msra.mxu0 0.0
          %324 = vmatprep.subr.mxu0 0.0
          %325 = vmatpush1.msra.mxu0 0.0
          %326 = vmatprep.subr.mxu0 0.0
          %327 = vmatpush1.msra.mxu0 0.0
          %328 = vmatprep.subr.mxu0 0.0
          %329 = vmatpush1.msra.mxu0 0.0
          %330 = vmatprep.subr.mxu0 0.0
          %331 = vmatpush1.msra.mxu0 0.0
          %332 = vmatprep.subr.mxu0 0.0
          %333 = vmatpush1.msra.mxu0 0.0
          %334 = vmatprep.subr.mxu0 0.0
          %335 = vmatpush1.msra.mxu0 0.0
          %336 = vmatprep.subr.mxu0 0.0
          %337 = vmatpush1.msra.mxu0 0.0
          %338 = vmatprep.subr.mxu0 0.0
          %339 = vmatpush1.msra.mxu0 0.0
          %340 = vmatprep.subr.mxu0 0.0
          %341 = vmatpush1.msra.mxu0 0.0
          %342 = vmatprep.subr.mxu0 0.0
          %343 = vmatpush1.msra.mxu0 0.0
          %344 = vmatprep.subr.mxu0 0.0
          %345 = vmatpush1.msra.mxu0 0.0
          %346 = vmatprep.subr.mxu0 0.0
          %347 = vmatpush1.msra.mxu0 0.0
          %348 = vmatprep.subr.mxu0 0.0
          %349 = vmatpush1.msra.mxu0 0.0
          %350 = vmatprep.subr.mxu0 0.0
          %351 = vmatpush1.msra.mxu0 0.0
          %352 = vmatprep.subr.mxu0 0.0
          %353 = vmatpush1.msra.mxu0 0.0
          %354 = vmatprep.subr.mxu0 0.0
          %355 = vmatpush1.msra.mxu0 0.0
          %356 = vmatprep.subr.mxu0 0.0
          %357 = vmatpush1.msra.mxu0 0.0
          %358 = vmatprep.subr.mxu0 0.0
          %359 = vmatpush1.msra.mxu0 0.0
          %360 = vmatprep.subr.mxu0 0.0
          %361 = vmatpush1.msra.mxu0 0.0
          %362 = vmatprep.subr.mxu0 0.0
          %363 = vmatpush1.msra.mxu0 0.0
          %364 = vmatprep.subr.mxu0 0.0
          %365 = vmatpush1.msra.mxu0 0.0
          %366 = vmatprep.subr.mxu0 0.0
          %367 = vmatpush1.msra.mxu0 0.0
          %368 = vmatprep.subr.mxu0 0.0
          %369 = vmatpush1.msra.mxu0 0.0
          %370 = vmatprep.subr.mxu0 0.0
          %371 = vmatpush1.msra.mxu0 0.0
          %372 = vmatprep.subr.mxu0 0.0
          %373 = vmatpush1.msra.mxu0 0.0
          %374 = vmatprep.subr.mxu0 0.0
          %375 = vmatpush1.msra.mxu0 0.0
          %376 = vmatprep.subr.mxu0 0.0
          %377 = vmatpush1.msra.mxu0 0.0
          %378 = vmatprep.subr.mxu0 0.0
          %379 = vmatpush1.msra.mxu0 0.0
          %380 = vmatprep.mubr.f32.mxu0 0.0
          %381 = vmatmul.mubr.f32.gmra.mrb[0].mxu0 %v311
          %v382 = vpop.f32.mrb[0].mxu0
          %v383 = vadd.f32 %v302, %v382
          %v384 = vpop.f32.mrb[0].mxu0
          %385 = vdwg.mxu0
          %v386 = vmax.f32 %v383, 0.0
          %v387 = vld [vmem:[#allocation8] sm:$0xff]
          %v388 = vld [vmem:[#allocation8 + $0x8] sm:$0xff]
          %v389 = vld [vmem:[#allocation8 + $0x10] sm:$0xff]
          %v390 = vld [vmem:[#allocation8 + $0x18] sm:$0xff]
          %v391 = vld [vmem:[%s4] sm:$0x1]
          %vm392 = vcmask 261120
          %v394 = vsel %vm392, %v386, 0
          %396 = vmatprep.subr.mxu0 0.0
          %397 = vmatpush1.msra.mxu0 %v387
          %398 = vmatprep.subr.mxu0 0.0
          %399 = vmatpush1.msra.mxu0 %v388
          %400 = vmatprep.subr.mxu0 0.0
          %401 = vmatpush1.msra.mxu0 %v389
          %402 = vmatprep.subr.mxu0 0.0
          %403 = vmatpush1.msra.mxu0 %v390
          %404 = vmatprep.subr.mxu0 0.0
          %405 = vmatpush1.msra.mxu0 0.0
          %406 = vmatprep.subr.mxu0 0.0
          %407 = vmatpush1.msra.mxu0 0.0
          %408 = vmatprep.subr.mxu0 0.0
          %409 = vmatpush1.msra.mxu0 0.0
          %410 = vmatprep.subr.mxu0 0.0
          %411 = vmatpush1.msra.mxu0 0.0
          %412 = vmatprep.subr.mxu0 0.0
          %413 = vmatpush1.msra.mxu0 0.0
          %414 = vmatprep.subr.mxu0 0.0
          %415 = vmatpush1.msra.mxu0 0.0
          %416 = vmatprep.subr.mxu0 0.0
          %417 = vmatpush1.msra.mxu0 0.0
          %418 = vmatprep.subr.mxu0 0.0
          %419 = vmatpush1.msra.mxu0 0.0
          %420 = vmatprep.subr.mxu0 0.0
          %421 = vmatpush1.msra.mxu0 0.0
          %422 = vmatprep.subr.mxu0 0.0
          %423 = vmatpush1.msra.mxu0 0.0
          %424 = vmatprep.subr.mxu0 0.0
          %425 = vmatpush1.msra.mxu0 0.0
          %426 = vmatprep.subr.mxu0 0.0
          %427 = vmatpush1.msra.mxu0 0.0
          %428 = vmatprep.subr.mxu0 0.0
          %429 = vmatpush1.msra.mxu0 0.0
          %430 = vmatprep.subr.mxu0 0.0
          %431 = vmatpush1.msra.mxu0 0.0
          %432 = vmatprep.subr.mxu0 0.0
          %433 = vmatpush1.msra.mxu0 0.0
          %434 = vmatprep.subr.mxu0 0.0
          %435 = vmatpush1.msra.mxu0 0.0
          %436 = vmatprep.subr.mxu0 0.0
          %437 = vmatpush1.msra.mxu0 0.0
          %438 = vmatprep.subr.mxu0 0.0
          %439 = vmatpush1.msra.mxu0 0.0
          %440 = vmatprep.subr.mxu0 0.0
          %441 = vmatpush1.msra.mxu0 0.0
          %442 = vmatprep.subr.mxu0 0.0
          %443 = vmatpush1.msra.mxu0 0.0
          %444 = vmatprep.subr.mxu0 0.0
          %445 = vmatpush1.msra.mxu0 0.0
          %446 = vmatprep.subr.mxu0 0.0
          %447 = vmatpush1.msra.mxu0 0.0
          %448 = vmatprep.subr.mxu0 0.0
          %449 = vmatpush1.msra.mxu0 0.0
          %450 = vmatprep.subr.mxu0 0.0
          %451 = vmatpush1.msra.mxu0 0.0
          %452 = vmatprep.subr.mxu0 0.0
          %453 = vmatpush1.msra.mxu0 0.0
          %454 = vmatprep.subr.mxu0 0.0
          %455 = vmatpush1.msra.mxu0 0.0
          %456 = vmatprep.subr.mxu0 0.0
          %457 = vmatpush1.msra.mxu0 0.0
          %458 = vmatprep.subr.mxu0 0.0
          %459 = vmatpush1.msra.mxu0 0.0
          %460 = vmatprep.mubr.f32.mxu0 0.0
          %461 = vmatmul.mubr.f32.gmra.mrb[0].mxu0 %v394
          %v462 = vpop.f32.mrb[0].mxu0
          %v463 = vadd.f32 %v391, %v462
          %v464 = vpop.f32.mrb[0].mxu0
          %465 = vdwg.mxu0
          %466 = vst [vmem:[%s281] sm:$0x1] %v463
        $region60: #{tpu_custom_call.1} parent=39 // pred_fallthru
          _
        %s467 = sand.u32 %s155, 1
        %s468 = scalar_lea.sflag [#allocation5], %s467
        %s469 = sand.u32 %s155, 1
        %s470 = scalar_lea.vmem [#allocation9], %s469
        // Predicated region
        $region61: #{tpu_custom_call.1} parent=39 // pred_check
          %p471 = pneg %p165
        $region62: #{tpu_custom_call.1} parent=39 // pred_check_branch
          %473 = sbr.rel (%p471) target = $region64
        $region63: #{tpu_custom_call.1} parent=39 // pred_region
          %s475 = ssub.s32 16, 16
          %476 = vsyncadd %s468, %s475
          %s477 = smul.addr %s27, 16
          %s478 = scalar_lea.hbm %s5, %s477
          %s480 = sshll.u32 %s470, 4
          %s481 = int_to_ptr.vmem [resolvable:$true] %s480
          %483 = dma.vmem_to_hbm [thread:$0]  %s481, 16, %s478, %s468
        $region64: #{tpu_custom_call.1} parent=39 // pred_fallthru
          _
      $region40: #{tpu_custom_call.1} parent=5 // pred_fallthru
        _
      %p484 = scmp.le.s32.totalorder 2, %s18
      // Predicated region
      $region65: #{tpu_custom_call.1} parent=5 // pred_check
        %p485 = pneg %p484
      $region66: #{tpu_custom_call.1} parent=5 // pred_check_branch
        %487 = sbr.rel (%p485) target = $region68
      $region67: #{tpu_custom_call.1} parent=5 // pred_region
        %s488 = ssub.s32 %s18, 2
        // Predicated region
        $region69: #{tpu_custom_call.1} parent=67 // pred_check
          %p489 = pneg %p171
        $region70: #{tpu_custom_call.1} parent=67 // pred_check_branch
          %491 = sbr.rel (%p489) target = $region72
        $region71: #{tpu_custom_call.1} parent=67 // pred_region
          %s492 = sand.u32 %s156, 1
          %s493 = scalar_lea.sflag [#allocation5], %s492
          %s494 = sand.u32 %s156, 1
          %s495 = scalar_lea.vmem [#allocation9], %s494
          %496 = dma.done %s493, 16
        $region72: #{tpu_custom_call.1} parent=67 // pred_fallthru
          _
      $region68: #{tpu_custom_call.1} parent=5 // pred_fallthru
        _
    $region6: #{tpu_custom_call.1} parent=1 // loop_footer
      %s22 = sadd.s32 1, %s18
    $region7: #{tpu_custom_call.1} parent=1 // loop_footer_branch
      %17 = sbr.rel target = $region3
    $region8: #{tpu_custom_call.1} parent=1 // loop_exit
      _
    %497 = vsyncpa [#allocation4], 1
    %s498 = scalar_lea.sflag [#allocation4], 1
    %499 = vsyncpa %s498, 1
    %500 = vsyncpa [#allocation7], 1
    %501 = vsyncpa [#allocation5], 1
    %s502 = scalar_lea.sflag [#allocation5], 1
    %503 = vsyncpa %s502, 1

</llo_original>
